<compile_context>
chip_gen: v5e
topology: v5e:2x2
jax: 0.10.0
libtpu: 0.0.40
codegen_flags: <defaults>
</compile_context>

<pallas_src>
import math

import numpy as np

import jax
import jax.numpy as jnp
from jax import lax
from jax.experimental import pallas as pl
from jax.experimental.pallas import tpu as pltpu


# ----------------------------------------------------------------------------
# Small fixed DAG (replaces the networkx DiGraph `dG`).
# Edges go child -> parent, so CHILDREN[t] == list(dG.predecessors(t)).
# ----------------------------------------------------------------------------
CHILDREN = {"A": [], "B": [], "C": ["A", "B"], "D": ["A"], "R": ["C", "D"]}
DEGREE = {"A": 2, "B": 1, "C": 3, "D": 2, "R": 2}      # in + out degree
TERM_LAYERS = [["A", "B"], ["C", "D"], ["R"]]          # leaf-removal layers
MIE_LAYER = ["A", "B"]

NUM_HIDDENS_RATIO = 4
INPUT_DIM = 16
BATCH = 8            # == one sublane tile; activations are (batch, features)
BN_EPS = 1e-5


# ----------------------------------------------------------------------------
# Parameters (PyTorch nn.Linear-style uniform init; BN gamma=1/beta=0 folded)
# ----------------------------------------------------------------------------
def build_params(key):
    term_dim = {t: int(DEGREE[t] * NUM_HIDDENS_RATIO) for t in CHILDREN}
    params = {}
    for term in sorted(CHILDREN):
        child_in = sum(term_dim[c] for c in CHILDREN[term])
        in_dim = child_in if child_in != 0 else INPUT_DIM
        hidden = term_dim[term]
        key, k1, k2, k3, k4 = jax.random.split(key, 5)
        b1 = 1.0 / math.sqrt(in_dim)
        b2 = 1.0 / math.sqrt(hidden)
        params[term] = {
            # main linear, stored (in, out) so the kernel computes x @ w
            "w1": jax.random.uniform(k1, (in_dim, hidden), jnp.float32, -b1, b1),
            "b1": jax.random.uniform(k2, (1, hidden), jnp.float32, -b1, b1),
            # aux linear: hidden -> 2
            "wa": jax.random.uniform(k3, (hidden, 2), jnp.float32, -b2, b2),
            "ba": jax.random.uniform(k4, (1, 2), jnp.float32, -b2, b2),
        }
    return params, term_dim


# ----------------------------------------------------------------------------
# One-time packing: build a SINGLE weight slab and a static per-layer plan.
#   * per layer, one lane-packed main weight per source layer (partial-matmul
#     form of the child concat)
#   * aux weights of layer l are lane-appended to the (l -> l+1) main weight
#     so z_l feeds ONE matmul for both paths (last layer's aux stays alone)
#   * every block starts on an 8-aligned row of the slab -> aligned loads
# ----------------------------------------------------------------------------
def pack_model(params, term_dim):
    L = len(TERM_LAYERS)
    layer_width = [sum(term_dim[t] for t in layer) for layer in TERM_LAYERS]
    aux_width = [2 * len(layer) for layer in TERM_LAYERS]

    term_loc = {}                      # term -> (layer idx, col offset in layer)
    for li, layer in enumerate(TERM_LAYERS):
        off = 0
        for t in layer:
            term_loc[t] = (li, off)
            off += term_dim[t]

    # --- raw per-layer packed blocks (numpy) --------------------------------
    main_blocks, main_bias, aux_blocks, aux_bias = [], [], [], []
    for li, layer in enumerate(TERM_LAYERS):
        W_l, A_l = layer_width[li], aux_width[li]
        bias = np.zeros((1, W_l), np.float32)
        wa = np.zeros((W_l, A_l), np.float32)
        ba = np.zeros((1, A_l), np.float32)
        srcs = {}                      # "x" or source-layer idx -> (src_w, W_l)
        for j, t in enumerate(layer):
            _, ot = term_loc[t]
            h = term_dim[t]
            w1 = np.asarray(params[t]["w1"], np.float32)
            bias[:, ot:ot + h] = np.asarray(params[t]["b1"], np.float32)
            if not CHILDREN[t]:                       # MIE term: reads raw x
                srcs.setdefault("x", np.zeros((INPUT_DIM, W_l), np.float32))
                srcs["x"][:, ot:ot + h] = w1
            else:                                     # concat == partial matmuls
                row = 0
                for c in CHILDREN[t]:
                    lc, oc = term_loc[c]
                    hc = term_dim[c]
                    srcs.setdefault(lc, np.zeros((layer_width[lc], W_l), np.float32))
                    srcs[lc][oc:oc + hc, ot:ot + h] = w1[row:row + hc, :]
                    row += hc
            wa[ot:ot + h, 2 * j:2 * j + 2] = np.asarray(params[t]["wa"], np.float32)
            ba[:, 2 * j:2 * j + 2] = np.asarray(params[t]["ba"], np.float32)
        main_blocks.append(srcs)
        main_bias.append(bias)
        aux_blocks.append(wa)
        aux_bias.append(ba)

    # aux of layer l is fused into layer l+1's matmul iff layer l feeds l+1
    fused_fwd = [(li + 1 < L) and (li in main_blocks[li + 1]) for li in range(L)]

    # --- assemble the single slab + static plan ------------------------------
    ROW_ALIGN = 8
    pieces = []                        # (row0, np matrix)
    cursor = 0

    def add(mat):
        nonlocal cursor
        r0 = cursor
        pieces.append((r0, mat))
        cursor = r0 + -(-mat.shape[0] // ROW_ALIGN) * ROW_ALIGN
        return r0

    # merged output slab column layout: [ main L0 | L1 | ... | aux L0 | L1 | ... ]
    main_lo = np.cumsum([0] + layer_width).tolist()
    total_term = main_lo[-1]
    aux_lo = np.cumsum([total_term] + aux_width).tolist()
    total_cols = aux_lo[-1]

    term_col, aux_col = {}, {}
    for li, layer in enumerate(TERM_LAYERS):
        for j, t in enumerate(layer):
            _, ot = term_loc[t]
            term_col[t] = (main_lo[li] + ot, main_lo[li] + ot + term_dim[t])
            aux_col[t] = (aux_lo[li] + 2 * j, aux_lo[li] + 2 * j + 2)

    plan = []
    for li in range(L):
        W_l = layer_width[li]
        fuse_prev = li >= 1 and fused_fwd[li - 1]
        A_prev = aux_width[li - 1] if fuse_prev else 0
        src_keys = sorted(main_blocks[li].keys(),
                          key=lambda s: -1 if s == "x" else s)
        srcs_meta = []
        for s in src_keys:
            mat = main_blocks[li][s]
            carries = fuse_prev and s == li - 1
            if carries:   # lane-append previous layer's block-diag aux weights
                mat = np.concatenate([mat, aux_blocks[li - 1]], axis=1)
            r0 = add(mat)
            srcs_meta.append(dict(src=s, row0=r0, nrows=mat.shape[0],
                                  ncols=mat.shape[1], carries_aux=carries))
        brow = main_bias[li]
        if fuse_prev:     # combined bias row: [main bias | prev aux bias]
            brow = np.concatenate([brow, aux_bias[li - 1]], axis=1)
        br0 = add(brow)
        own = None
        if not fused_fwd[li]:          # last layer (or non-feeding layer): standalone aux
            ar0 = add(aux_blocks[li])
            abr0 = add(aux_bias[li])
            own = dict(w_row0=ar0, w_nrows=W_l, w_ncols=aux_width[li], b_row0=abr0)
        plan.append(dict(
            width=W_l, srcs=srcs_meta,
            bias_row0=br0, bias_ncols=brow.shape[1],
            fuse_prev=fuse_prev, prev_aux_width=A_prev,
            own_aux=own, aux_width=aux_width[li],
            out_main_lo=main_lo[li], out_aux_lo=aux_lo[li],
            out_prev_aux_lo=aux_lo[li - 1] if li >= 1 else 0))

    total_rows = max(cursor, ROW_ALIGN)
    max_cols = max(m.shape[1] for _, m in pieces)
    slab = np.zeros((total_rows, max_cols), np.float32)
    for r0, m in pieces:
        slab[r0:r0 + m.shape[0], :m.shape[1]] = m

    return plan, jnp.asarray(slab), term_col, aux_col, total_cols


# ----------------------------------------------------------------------------
# The single fused Pallas kernel
# ----------------------------------------------------------------------------
def _bn_train(y):
    # Training-mode BatchNorm1d: batch stats, biased variance, eps=1e-5,
    # gamma=1/beta=0 folded.  Per-feature, so identical whether applied per
    # term or on a packed layer slab.
    mean = jnp.mean(y, axis=0, keepdims=True)
    d = y - mean
    var = jnp.mean(d * d, axis=0, keepdims=True)
    return d * lax.rsqrt(var + BN_EPS)


def make_fused_kernel(plan):
    def kernel(x_ref, w_ref, out_ref):
        x = x_ref[...]
        z_layers = []                                 # per-layer BN outputs, kept in vregs
        for s in plan:
            W_l = s["width"]
            y = None
            aux_prev_pre = None
            # main path: sum of partial matmuls over source layers == concat @ W
            for src in s["srcs"]:
                w = w_ref[src["row0"]:src["row0"] + src["nrows"], 0:src["ncols"]]
                v = x if src["src"] == "x" else z_layers[src["src"]]
                part = jnp.dot(v, w, preferred_element_type=jnp.float32)
                if src["carries_aux"]:               # fused prev-layer aux columns
                    aux_prev_pre = part[:, W_l:]
                    part = part[:, :W_l]
                y = part if y is None else y + part
            b = w_ref[s["bias_row0"]:s["bias_row0"] + 1, 0:s["bias_ncols"]]
            if s["fuse_prev"]:
                aux_prev = _bn_train(jnp.tanh(aux_prev_pre + b[:, W_l:]))
                lo = s["out_prev_aux_lo"]
                out_ref[:, lo:lo + s["prev_aux_width"]] = aux_prev
                y = y + b[:, :W_l]
            else:
                y = y + b
            z = _bn_train(jnp.tanh(y))
            z_layers.append(z)
            lo = s["out_main_lo"]
            out_ref[:, lo:lo + W_l] = z
            # standalone aux (only for layers whose aux is not fused forward)
            if s["own_aux"] is not None:
                oa = s["own_aux"]
                wa = w_ref[oa["w_row0"]:oa["w_row0"] + oa["w_nrows"], 0:oa["w_ncols"]]
                ba = w_ref[oa["b_row0"]:oa["b_row0"] + 1, 0:oa["w_ncols"]]
                a = _bn_train(jnp.tanh(
                    jnp.dot(z, wa, preferred_element_type=jnp.float32) + ba))
                lo = s["out_aux_lo"]
                out_ref[:, lo:lo + s["aux_width"]] = a

    return kernel


def make_fused_forward(plan, batch, total_cols):
    kernel = make_fused_kernel(plan)
    vspec = pl.BlockSpec(memory_space=pltpu.MemorySpace.VMEM)

    @jax.jit
    def fwd(x, wslab):
        # Returns the packed (batch, total_cols) output slab; per-term views
        # are sliced by the caller outside jit.
        return pl.pallas_call(
            kernel,
            out_shape=jax.ShapeDtypeStruct((batch, total_cols), jnp.float32),
            in_specs=[vspec, vspec],
            out_specs=vspec,
        )(x, wslab)

    return fwd


# ----------------------------------------------------------------------------
# Pure-JAX reference (mirrors the PyTorch forward loop exactly)
# ----------------------------------------------------------------------------
def reference_forward(params, x):
    def bn(y):
        m = jnp.mean(y, axis=0, keepdims=True)
        v = jnp.mean((y - m) ** 2, axis=0, keepdims=True)
        return (y - m) * lax.rsqrt(v + BN_EPS)

    term_out, aux_out = {}, {}
    for layer in TERM_LAYERS:
        for t in layer:
            if t in MIE_LAYER:
                ci = x
            else:
                ci = jnp.concatenate([term_out[c] for c in CHILDREN[t]], axis=1)
            p = params[t]
            z = bn(jnp.tanh(
                jnp.dot(ci, p["w1"], precision=lax.Precision.HIGHEST) + p["b1"]))
            term_out[t] = z
            aux_out[t] = bn(jnp.tanh(
                jnp.dot(z, p["wa"], precision=lax.Precision.HIGHEST) + p["ba"]))
    return aux_out, term_out


if __name__ == "__main__":
    key = jax.random.PRNGKey(0)
    key, pkey, xkey = jax.random.split(key, 3)
    params, term_dim = build_params(pkey)
    x = jax.random.normal(xkey, (BATCH, INPUT_DIM), dtype=jnp.float32)

    plan, wslab, term_col, aux_col, total_cols = pack_model(params, term_dim)
    fwd = make_fused_forward(plan, BATCH, total_cols)

    out_slab = fwd(x, wslab)
    jax.block_until_ready(out_slab)

    # Split the packed output slab OUTSIDE jit using the static column maps.
    out_np = np.asarray(out_slab)
    term_out_map = {t: out_np[:, lo:hi] for t, (lo, hi) in term_col.items()}
    aux_out_map = {t: out_np[:, lo:hi] for t, (lo, hi) in aux_col.items()}

    # Correctness vs. the straightforward per-term reference.
    # Tolerance is loose on purpose: MXU f32 dots may use reduced-precision
    # passes vs. the HIGHEST-precision XLA reference, and BN's 1/std amplifies
    # small pre-activation differences.  Post-BN values have std == 1, so
    # 5e-2 still catches any wiring/packing error (which would be O(1)).
    ref_aux, ref_term = reference_forward(params, x)
    for t in CHILDREN:
        assert term_out_map[t].shape == (BATCH, term_dim[t])
        assert aux_out_map[t].shape == (BATCH, 2)
        np.testing.assert_allclose(term_out_map[t], np.asarray(ref_term[t]),
                                   rtol=5e-2, atol=5e-2)
        np.testing.assert_allclose(aux_out_map[t], np.asarray(ref_aux[t]),
                                   rtol=5e-2, atol=5e-2)

    print("KERNEL_OK")
</pallas_src>

<mosaic_0001>
module attributes {stable_mosaic.version = 11 : i64} {
  func.func @kernel(%arg0: memref<8x16xf32, #tpu.memory_space<vmem>>, %arg1: memref<96x24xf32, #tpu.memory_space<vmem>>, %arg2: memref<8x50xf32, #tpu.memory_space<vmem>>) attributes {dimension_semantics = [], scalar_prefetch = 0 : i64, scratch_operands = 0 : i64, tpu.core_type = #tpu.core_type<tc>} {
    %c0 = arith.constant 0 : index
    %c0_0 = arith.constant 0 : index
    %0 = vector.load %arg0[%c0, %c0_0] : memref<8x16xf32, #tpu.memory_space<vmem>>, vector<8x16xf32>
    %c0_1 = arith.constant 0 : index
    %c0_2 = arith.constant 0 : index
    %1 = vector.load %arg1[%c0_1, %c0_2] : memref<96x24xf32, #tpu.memory_space<vmem>>, vector<16x12xf32>
    %cst = arith.constant dense<0.000000e+00> : vector<8x12xf32>
    %2 = tpu.matmul %0, %1, %cst {dimension_numbers = #tpu.dot_dimension_numbers<[1], [0], [0], [1], [0, 0, 1, 1], [], []>} : vector<8x16xf32>, vector<16x12xf32>, vector<8x12xf32> -> vector<8x12xf32>
    %c16 = arith.constant 16 : index
    %c0_3 = arith.constant 0 : index
    %3 = vector.load %arg1[%c16, %c0_3] : memref<96x24xf32, #tpu.memory_space<vmem>>, vector<1x12xf32>
    %4 = vector.broadcast %3 : vector<1x12xf32> to vector<8x12xf32>
    %5 = arith.addf %2, %4 : vector<8x12xf32>
    %6 = math.tanh %5 : vector<8x12xf32>
    %cst_4 = arith.constant dense<0.000000e+00> : vector<12xf32>
    %7 = vector.multi_reduction <add>, %6, %cst_4 [0] : vector<8x12xf32> to vector<12xf32>
    %8 = vector.shape_cast %7 : vector<12xf32> to vector<1x12xf32>
    %cst_5 = arith.constant 8.000000e+00 : f32
    %9 = vector.broadcast %cst_5 : f32 to vector<1x12xf32>
    %10 = arith.divf %8, %9 : vector<1x12xf32>
    %11 = vector.broadcast %10 : vector<1x12xf32> to vector<8x12xf32>
    %12 = arith.subf %6, %11 : vector<8x12xf32>
    %13 = arith.mulf %12, %12 : vector<8x12xf32>
    %cst_6 = arith.constant dense<0.000000e+00> : vector<12xf32>
    %14 = vector.multi_reduction <add>, %13, %cst_6 [0] : vector<8x12xf32> to vector<12xf32>
    %15 = vector.shape_cast %14 : vector<12xf32> to vector<1x12xf32>
    %cst_7 = arith.constant 8.000000e+00 : f32
    %16 = vector.broadcast %cst_7 : f32 to vector<1x12xf32>
    %17 = arith.divf %15, %16 : vector<1x12xf32>
    %cst_8 = arith.constant 9.99999974E-6 : f32
    %18 = vector.broadcast %cst_8 : f32 to vector<1x12xf32>
    %19 = arith.addf %17, %18 : vector<1x12xf32>
    %20 = math.rsqrt %19 : vector<1x12xf32>
    %21 = vector.broadcast %20 : vector<1x12xf32> to vector<8x12xf32>
    %22 = arith.mulf %12, %21 : vector<8x12xf32>
    %c0_9 = arith.constant 0 : index
    %c0_10 = arith.constant 0 : index
    %23 = vector.load %arg2[%c0_9, %c0_10] : memref<8x50xf32, #tpu.memory_space<vmem>>, vector<8x12xf32>
    tpu.vector_store %arg2[%c0_9, %c0_10], %22 {strides = array<i32>} : memref<8x50xf32, #tpu.memory_space<vmem>>, vector<8x12xf32>,
    %c24 = arith.constant 24 : index
    %c0_11 = arith.constant 0 : index
    %24 = vector.load %arg1[%c24, %c0_11] : memref<96x24xf32, #tpu.memory_space<vmem>>, vector<12x24xf32>
    %cst_12 = arith.constant dense<0.000000e+00> : vector<8x24xf32>
    %25 = tpu.matmul %22, %24, %cst_12 {dimension_numbers = #tpu.dot_dimension_numbers<[1], [0], [0], [1], [0, 0, 1, 1], [], []>} : vector<8x12xf32>, vector<12x24xf32>, vector<8x24xf32> -> vector<8x24xf32>
    %26 = vector.extract_strided_slice %25 {offsets = [0, 20], sizes = [8, 4], strides = [1, 1]} : vector<8x24xf32> to vector<8x4xf32>
    %27 = vector.extract_strided_slice %25 {offsets = [0, 0], sizes = [8, 20], strides = [1, 1]} : vector<8x24xf32> to vector<8x20xf32>
    %c40 = arith.constant 40 : index
    %c0_13 = arith.constant 0 : index
    %28 = vector.load %arg1[%c40, %c0_13] : memref<96x24xf32, #tpu.memory_space<vmem>>, vector<1x24xf32>
    %29 = vector.extract_strided_slice %28 {offsets = [0, 20], sizes = [1, 4], strides = [1, 1]} : vector<1x24xf32> to vector<1x4xf32>
    %30 = vector.broadcast %29 : vector<1x4xf32> to vector<8x4xf32>
    %31 = arith.addf %26, %30 : vector<8x4xf32>
    %32 = math.tanh %31 : vector<8x4xf32>
    %cst_14 = arith.constant dense<0.000000e+00> : vector<4xf32>
    %33 = vector.multi_reduction <add>, %32, %cst_14 [0] : vector<8x4xf32> to vector<4xf32>
    %34 = vector.shape_cast %33 : vector<4xf32> to vector<1x4xf32>
    %cst_15 = arith.constant 8.000000e+00 : f32
    %35 = vector.broadcast %cst_15 : f32 to vector<1x4xf32>
    %36 = arith.divf %34, %35 : vector<1x4xf32>
    %37 = vector.broadcast %36 : vector<1x4xf32> to vector<8x4xf32>
    %38 = arith.subf %32, %37 : vector<8x4xf32>
    %39 = arith.mulf %38, %38 : vector<8x4xf32>
    %cst_16 = arith.constant dense<0.000000e+00> : vector<4xf32>
    %40 = vector.multi_reduction <add>, %39, %cst_16 [0] : vector<8x4xf32> to vector<4xf32>
    %41 = vector.shape_cast %40 : vector<4xf32> to vector<1x4xf32>
    %cst_17 = arith.constant 8.000000e+00 : f32
    %42 = vector.broadcast %cst_17 : f32 to vector<1x4xf32>
    %43 = arith.divf %41, %42 : vector<1x4xf32>
    %cst_18 = arith.constant 9.99999974E-6 : f32
    %44 = vector.broadcast %cst_18 : f32 to vector<1x4xf32>
    %45 = arith.addf %43, %44 : vector<1x4xf32>
    %46 = math.rsqrt %45 : vector<1x4xf32>
    %47 = vector.broadcast %46 : vector<1x4xf32> to vector<8x4xf32>
    %48 = arith.mulf %38, %47 : vector<8x4xf32>
    %c0_19 = arith.constant 0 : index
    %c40_20 = arith.constant 40 : index
    %49 = vector.load %arg2[%c0_19, %c40_20] : memref<8x50xf32, #tpu.memory_space<vmem>>, vector<8x4xf32>
    tpu.vector_store %arg2[%c0_19, %c40_20], %48 {strides = array<i32>} : memref<8x50xf32, #tpu.memory_space<vmem>>, vector<8x4xf32>,
    %50 = vector.extract_strided_slice %28 {offsets = [0, 0], sizes = [1, 20], strides = [1, 1]} : vector<1x24xf32> to vector<1x20xf32>
    %51 = vector.broadcast %50 : vector<1x20xf32> to vector<8x20xf32>
    %52 = arith.addf %27, %51 : vector<8x20xf32>
    %53 = math.tanh %52 : vector<8x20xf32>
    %cst_21 = arith.constant dense<0.000000e+00> : vector<20xf32>
    %54 = vector.multi_reduction <add>, %53, %cst_21 [0] : vector<8x20xf32> to vector<20xf32>
    %55 = vector.shape_cast %54 : vector<20xf32> to vector<1x20xf32>
    %cst_22 = arith.constant 8.000000e+00 : f32
    %56 = vector.broadcast %cst_22 : f32 to vector<1x20xf32>
    %57 = arith.divf %55, %56 : vector<1x20xf32>
    %58 = vector.broadcast %57 : vector<1x20xf32> to vector<8x20xf32>
    %59 = arith.subf %53, %58 : vector<8x20xf32>
    %60 = arith.mulf %59, %59 : vector<8x20xf32>
    %cst_23 = arith.constant dense<0.000000e+00> : vector<20xf32>
    %61 = vector.multi_reduction <add>, %60, %cst_23 [0] : vector<8x20xf32> to vector<20xf32>
    %62 = vector.shape_cast %61 : vector<20xf32> to vector<1x20xf32>
    %cst_24 = arith.constant 8.000000e+00 : f32
    %63 = vector.broadcast %cst_24 : f32 to vector<1x20xf32>
    %64 = arith.divf %62, %63 : vector<1x20xf32>
    %cst_25 = arith.constant 9.99999974E-6 : f32
    %65 = vector.broadcast %cst_25 : f32 to vector<1x20xf32>
    %66 = arith.addf %64, %65 : vector<1x20xf32>
    %67 = math.rsqrt %66 : vector<1x20xf32>
    %68 = vector.broadcast %67 : vector<1x20xf32> to vector<8x20xf32>
    %69 = arith.mulf %59, %68 : vector<8x20xf32>
    %c0_26 = arith.constant 0 : index
    %c12 = arith.constant 12 : index
    %70 = vector.load %arg2[%c0_26, %c12] : memref<8x50xf32, #tpu.memory_space<vmem>>, vector<8x20xf32>
    tpu.vector_store %arg2[%c0_26, %c12], %69 {strides = array<i32>} : memref<8x50xf32, #tpu.memory_space<vmem>>, vector<8x20xf32>,
    %c48 = arith.constant 48 : index
    %c0_27 = arith.constant 0 : index
    %71 = vector.load %arg1[%c48, %c0_27] : memref<96x24xf32, #tpu.memory_space<vmem>>, vector<20x12xf32>
    %cst_28 = arith.constant dense<0.000000e+00> : vector<8x12xf32>
    %72 = tpu.matmul %69, %71, %cst_28 {dimension_numbers = #tpu.dot_dimension_numbers<[1], [0], [0], [1], [0, 0, 1, 1], [], []>} : vector<8x20xf32>, vector<20x12xf32>, vector<8x12xf32> -> vector<8x12xf32>
    %73 = vector.extract_strided_slice %72 {offsets = [0, 8], sizes = [8, 4], strides = [1, 1]} : vector<8x12xf32> to vector<8x4xf32>
    %74 = vector.extract_strided_slice %72 {offsets = [0, 0], sizes = [8, 8], strides = [1, 1]} : vector<8x12xf32> to vector<8x8xf32>
    %c72 = arith.constant 72 : index
    %c0_29 = arith.constant 0 : index
    %75 = vector.load %arg1[%c72, %c0_29] : memref<96x24xf32, #tpu.memory_space<vmem>>, vector<1x12xf32>
    %76 = vector.extract_strided_slice %75 {offsets = [0, 8], sizes = [1, 4], strides = [1, 1]} : vector<1x12xf32> to vector<1x4xf32>
    %77 = vector.broadcast %76 : vector<1x4xf32> to vector<8x4xf32>
    %78 = arith.addf %73, %77 : vector<8x4xf32>
    %79 = math.tanh %78 : vector<8x4xf32>
    %cst_30 = arith.constant dense<0.000000e+00> : vector<4xf32>
    %80 = vector.multi_reduction <add>, %79, %cst_30 [0] : vector<8x4xf32> to vector<4xf32>
    %81 = vector.shape_cast %80 : vector<4xf32> to vector<1x4xf32>
    %cst_31 = arith.constant 8.000000e+00 : f32
    %82 = vector.broadcast %cst_31 : f32 to vector<1x4xf32>
    %83 = arith.divf %81, %82 : vector<1x4xf32>
    %84 = vector.broadcast %83 : vector<1x4xf32> to vector<8x4xf32>
    %85 = arith.subf %79, %84 : vector<8x4xf32>
    %86 = arith.mulf %85, %85 : vector<8x4xf32>
    %cst_32 = arith.constant dense<0.000000e+00> : vector<4xf32>
    %87 = vector.multi_reduction <add>, %86, %cst_32 [0] : vector<8x4xf32> to vector<4xf32>
    %88 = vector.shape_cast %87 : vector<4xf32> to vector<1x4xf32>
    %cst_33 = arith.constant 8.000000e+00 : f32
    %89 = vector.broadcast %cst_33 : f32 to vector<1x4xf32>
    %90 = arith.divf %88, %89 : vector<1x4xf32>
    %cst_34 = arith.constant 9.99999974E-6 : f32
    %91 = vector.broadcast %cst_34 : f32 to vector<1x4xf32>
    %92 = arith.addf %90, %91 : vector<1x4xf32>
    %93 = math.rsqrt %92 : vector<1x4xf32>
    %94 = vector.broadcast %93 : vector<1x4xf32> to vector<8x4xf32>
    %95 = arith.mulf %85, %94 : vector<8x4xf32>
    %c0_35 = arith.constant 0 : index
    %c44 = arith.constant 44 : index
    %96 = vector.load %arg2[%c0_35, %c44] : memref<8x50xf32, #tpu.memory_space<vmem>>, vector<8x4xf32>
    tpu.vector_store %arg2[%c0_35, %c44], %95 {strides = array<i32>} : memref<8x50xf32, #tpu.memory_space<vmem>>, vector<8x4xf32>,
    %97 = vector.extract_strided_slice %75 {offsets = [0, 0], sizes = [1, 8], strides = [1, 1]} : vector<1x12xf32> to vector<1x8xf32>
    %98 = vector.broadcast %97 : vector<1x8xf32> to vector<8x8xf32>
    %99 = arith.addf %74, %98 : vector<8x8xf32>
    %100 = math.tanh %99 : vector<8x8xf32>
    %cst_36 = arith.constant dense<0.000000e+00> : vector<8xf32>
    %101 = vector.multi_reduction <add>, %100, %cst_36 [0] : vector<8x8xf32> to vector<8xf32>
    %102 = vector.shape_cast %101 : vector<8xf32> to vector<1x8xf32>
    %cst_37 = arith.constant 8.000000e+00 : f32
    %103 = vector.broadcast %cst_37 : f32 to vector<1x8xf32>
    %104 = arith.divf %102, %103 : vector<1x8xf32>
    %105 = vector.broadcast %104 : vector<1x8xf32> to vector<8x8xf32>
    %106 = arith.subf %100, %105 : vector<8x8xf32>
    %107 = arith.mulf %106, %106 : vector<8x8xf32>
    %cst_38 = arith.constant dense<0.000000e+00> : vector<8xf32>
    %108 = vector.multi_reduction <add>, %107, %cst_38 [0] : vector<8x8xf32> to vector<8xf32>
    %109 = vector.shape_cast %108 : vector<8xf32> to vector<1x8xf32>
    %cst_39 = arith.constant 8.000000e+00 : f32
    %110 = vector.broadcast %cst_39 : f32 to vector<1x8xf32>
    %111 = arith.divf %109, %110 : vector<1x8xf32>
    %cst_40 = arith.constant 9.99999974E-6 : f32
    %112 = vector.broadcast %cst_40 : f32 to vector<1x8xf32>
    %113 = arith.addf %111, %112 : vector<1x8xf32>
    %114 = math.rsqrt %113 : vector<1x8xf32>
    %115 = vector.broadcast %114 : vector<1x8xf32> to vector<8x8xf32>
    %116 = arith.mulf %106, %115 : vector<8x8xf32>
    %c0_41 = arith.constant 0 : index
    %c32 = arith.constant 32 : index
    %117 = vector.load %arg2[%c0_41, %c32] : memref<8x50xf32, #tpu.memory_space<vmem>>, vector<8x8xf32>
    tpu.vector_store %arg2[%c0_41, %c32], %116 {strides = array<i32>} : memref<8x50xf32, #tpu.memory_space<vmem>>, vector<8x8xf32>,
    %c80 = arith.constant 80 : index
    %c0_42 = arith.constant 0 : index
    %118 = vector.load %arg1[%c80, %c0_42] : memref<96x24xf32, #tpu.memory_space<vmem>>, vector<8x2xf32>
    %c88 = arith.constant 88 : index
    %c0_43 = arith.constant 0 : index
    %119 = vector.load %arg1[%c88, %c0_43] : memref<96x24xf32, #tpu.memory_space<vmem>>, vector<1x2xf32>
    %cst_44 = arith.constant dense<0.000000e+00> : vector<8x2xf32>
    %120 = tpu.matmul %116, %118, %cst_44 {dimension_numbers = #tpu.dot_dimension_numbers<[1], [0], [0], [1], [0, 0, 1, 1], [], []>} : vector<8x8xf32>, vector<8x2xf32>, vector<8x2xf32> -> vector<8x2xf32>
    %121 = vector.broadcast %119 : vector<1x2xf32> to vector<8x2xf32>
    %122 = arith.addf %120, %121 : vector<8x2xf32>
    %123 = math.tanh %122 : vector<8x2xf32>
    %cst_45 = arith.constant dense<0.000000e+00> : vector<2xf32>
    %124 = vector.multi_reduction <add>, %123, %cst_45 [0] : vector<8x2xf32> to vector<2xf32>
    %125 = vector.shape_cast %124 : vector<2xf32> to vector<1x2xf32>
    %cst_46 = arith.constant 8.000000e+00 : f32
    %126 = vector.broadcast %cst_46 : f32 to vector<1x2xf32>
    %127 = arith.divf %125, %126 : vector<1x2xf32>
    %128 = vector.broadcast %127 : vector<1x2xf32> to vector<8x2xf32>
    %129 = arith.subf %123, %128 : vector<8x2xf32>
    %130 = arith.mulf %129, %129 : vector<8x2xf32>
    %cst_47 = arith.constant dense<0.000000e+00> : vector<2xf32>
    %131 = vector.multi_reduction <add>, %130, %cst_47 [0] : vector<8x2xf32> to vector<2xf32>
    %132 = vector.shape_cast %131 : vector<2xf32> to vector<1x2xf32>
    %cst_48 = arith.constant 8.000000e+00 : f32
    %133 = vector.broadcast %cst_48 : f32 to vector<1x2xf32>
    %134 = arith.divf %132, %133 : vector<1x2xf32>
    %cst_49 = arith.constant 9.99999974E-6 : f32
    %135 = vector.broadcast %cst_49 : f32 to vector<1x2xf32>
    %136 = arith.addf %134, %135 : vector<1x2xf32>
    %137 = math.rsqrt %136 : vector<1x2xf32>
    %138 = vector.broadcast %137 : vector<1x2xf32> to vector<8x2xf32>
    %139 = arith.mulf %129, %138 : vector<8x2xf32>
    %c0_50 = arith.constant 0 : index
    %c48_51 = arith.constant 48 : index
    %140 = vector.load %arg2[%c0_50, %c48_51] : memref<8x50xf32, #tpu.memory_space<vmem>>, vector<8x2xf32>
    tpu.vector_store %arg2[%c0_50, %c48_51], %139 {strides = array<i32>} : memref<8x50xf32, #tpu.memory_space<vmem>>, vector<8x2xf32>,
    return
  }
}

</mosaic_0001>

<llo_original>
// kernel: fwd.1
$region0: #{fwd.1}
  #allocation0 [shape = 'u32[]', space=smem, size = 0x4, offset = 0x4, fixed_abs, tag = 'smem constant byte address 0x4 - core index']
  #allocation1 [shape = 'u32[72,128]{1,0:T(1,128)}', space=vmem, size = 0x9000, scoped, tag = 'internal scratch']
  %s0 = inlined_call_operand.vmem [shape: f32[8,16], index: 0, kind: input, shape index: {}]
  %s1 = inlined_call_operand.vmem [shape: f32[96,24], index: 1, kind: input, shape index: {}]
  %s2 = inlined_call_operand.hbm [shape: f32[8,50], index: 2, kind: output, shape index: {}]
  %s3 = sld [smem:[#allocation0]]
  $region18: #{fwd.1} parent=0
    _
  %s5 = ssub.s32 1, %s3
  %s6 = scalar_select 0, %s5, %s3
  $region1: #{fwd.1} parent=0
    #allocation2 [shape = 'u8[4096]{0}', space=vmem, size = 0x1000, scoped, tag = 'output window, operand 0, single buffered']
    #allocation3 [shape = 's32[1]{0}', space=sflag, size = 0x4, scoped, tag = 'scoped memory for fwd.1']
    %7 = vsyncpa [#allocation3], 0
    // Predicated region
    $region2: #{fwd.1} parent=1 // pred_check
      _
    $region3: #{fwd.1} parent=1 // pred_check_branch
      %9 = sbr.rel (0) target = $region5
    $region4: #{fwd.1} parent=1 // pred_region
      _
    $region5: #{fwd.1} parent=1 // pred_fallthru
      _
    // Predicated region
    $region6: #{fwd.1} parent=1 // pred_check
      _
    $region7: #{fwd.1} parent=1 // pred_check_branch
      %11 = sbr.rel (0) target = $region9
    $region8: #{fwd.1} parent=1 // pred_region
      _
    $region9: #{fwd.1} parent=1 // pred_fallthru
      _
    %v12 = vld [vmem:[%s0] sm:$0xff]
    %v13 = vld [vmem:[%s1] sm:$0xff]
    %v14 = vld [vmem:[%s1 + $0x8] sm:$0xff]
    %v15 = vld [vmem:[%s1 + $0x10] sm:$0x1]
    %v16 = vperm.slane %v15, 0
    %vm17 = vcmask 130048
    %v19 = vsel %vm17, %v12, 0
    %21 = vmatpush.msra.mxu0 0.0
    %22 = vmatpush.msra.mxu0 0.0
    %23 = vmatpush.msra.mxu0 0.0
    %24 = vmatpush.msra.mxu0 0.0
    %25 = vmatpush.msra.mxu0 0.0
    %26 = vmatpush.msra.mxu0 0.0
    %27 = vmatpush.msra.mxu0 0.0
    %28 = vmatpush.msra.mxu0 0.0
    %29 = vmatpush.msra.mxu0 0.0
    %30 = vmatpush.msra.mxu0 0.0
    %31 = vmatpush.msra.mxu0 0.0
    %32 = vmatpush.msra.mxu0 0.0
    %33 = vmatpush.msra.mxu0 0.0
    %34 = vmatpush.msra.mxu0 0.0
    %35 = vmatpush.msra.mxu0 %v14
    %36 = vmatpush.msra.mxu0 %v13
    %37 = vmatmul.f32.gmra.mxu0 %v19
    %v38 = vpop.f32.mrf.mxu0
    %v39 = vadd.f32 %v16, %v38
    %40 = vdwg.mxu0
    %v41 = vtanh.pop %v39
    %vm42 = vcmask 97280
    %v43 = vsel %vm42, %v41, 0.0
    %v44 = vrot.slane %v43, 4
    %v45 = vadd.f32 %v43, %v44
    %v46 = vrot.slane %v45, 2
    %v47 = vadd.f32 %v45, %v46
    %v48 = vrot.slane %v47, 1
    %v49 = vadd.f32 %v47, %v48
    %v50 = vrcp.pop 8.0
    %v51 = vmul.f32 8.0, %v50
    %v52 = vsub.f32 1.0, %v51
    %v53 = vmul.f32 %v50, %v52
    %v54 = vadd.f32 %v50, %v53
    %vm55 = vweird.f32 %v50
    %v56 = vsel %vm55, %v50, %v54
    %v57 = vmul.f32 %v49, %v56
    %v58 = vsub.f32 %v41, %v57
    %v59 = vmul.f32 %v58, %v58
    %v60 = vsel %vm42, %v59, 0.0
    %v61 = vrot.slane %v60, 4
    %v62 = vadd.f32 %v60, %v61
    %v63 = vrot.slane %v62, 2
    %v64 = vadd.f32 %v62, %v63
    %v65 = vrot.slane %v64, 1
    %v66 = vadd.f32 %v64, %v65
    %v67 = vmul.f32 %v66, %v56
    %v68 = vadd.f32 %v67, 1e-05
    %v69 = vrsqrt.pop %v68
    %v70 = vmul.f32 %v69, %v68
    %v71 = vmul.f32 %v70, %v69
    %v72 = vmul.f32 0.5, %v71
    %v73 = vsub.f32 1.5, %v72
    %v74 = vmul.f32 %v69, %v73
    %vm75 = vweird.f32 %v68
    %vm76 = vweird.f32 %v69
    %vm77 = vmor %vm75, %vm76
    %v78 = vsel %vm77, %v69, %v74
    %v79 = vmul.f32 %v58, %v78
    %80 = vst.msk [vmem:[#allocation2] sm:$0xff] %vm42, %v79
    %v81 = vld [vmem:[%s1 + $0x18] sm:$0xff]
    %v82 = vld [vmem:[%s1 + $0x20] sm:$0xf]
    %v84 = vsel %vm42, %v79, 0
    %vm86 = vcmask 1043456
    %v88 = vsel %vm86, %v82, 0
    %90 = vmatpush.msra.mxu0 0.0
    %91 = vmatpush.msra.mxu0 0.0
    %92 = vmatpush.msra.mxu0 0.0
    %93 = vmatpush.msra.mxu0 0.0
    %94 = vmatpush.msra.mxu0 0.0
    %95 = vmatpush.msra.mxu0 0.0
    %96 = vmatpush.msra.mxu0 0.0
    %97 = vmatpush.msra.mxu0 0.0
    %98 = vmatpush.msra.mxu0 0.0
    %99 = vmatpush.msra.mxu0 0.0
    %100 = vmatpush.msra.mxu0 0.0
    %101 = vmatpush.msra.mxu0 0.0
    %102 = vmatpush.msra.mxu0 0.0
    %103 = vmatpush.msra.mxu0 0.0
    %104 = vmatpush.msra.mxu0 %v88
    %105 = vmatpush.msra.mxu0 %v81
    %106 = vmatmul.f32.gmra.mxu0 %v84
    %v107 = vpop.f32.mrf.mxu0
    %v108 = vadd.f32 0.0, %v107
    %109 = vdwg.mxu0
    %v110 = vld [vmem:[%s1 + $0x28] sm:$0x1]
    %v111 = vperm.slane %v110, 0
    %v112 = vadd.f32 %v108, %v111
    %v113 = vtanh.pop %v112
    %vm114 = vcmask 195744
    %v115 = vsel %vm114, %v113, 0.0
    %v116 = vrot.slane %v115, 4
    %v117 = vadd.f32 %v115, %v116
    %v118 = vrot.slane %v117, 2
    %v119 = vadd.f32 %v117, %v118
    %v120 = vrot.slane %v119, 1
    %v121 = vadd.f32 %v119, %v120
    %v122 = vmul.f32 %v121, %v56
    %v123 = vsub.f32 %v113, %v122
    %v124 = vmul.f32 %v123, %v123
    %v125 = vsel %vm114, %v124, 0.0
    %v126 = vrot.slane %v125, 4
    %v127 = vadd.f32 %v125, %v126
    %v128 = vrot.slane %v127, 2
    %v129 = vadd.f32 %v127, %v128
    %v130 = vrot.slane %v129, 1
    %v131 = vadd.f32 %v129, %v130
    %v132 = vmul.f32 %v131, %v56
    %v133 = vadd.f32 %v132, 1e-05
    %v134 = vrsqrt.pop %v133
    %v135 = vmul.f32 %v134, %v133
    %v136 = vmul.f32 %v135, %v134
    %v137 = vmul.f32 0.5, %v136
    %v138 = vsub.f32 1.5, %v137
    %v139 = vmul.f32 %v134, %v138
    %vm140 = vweird.f32 %v133
    %vm141 = vweird.f32 %v134
    %vm142 = vmor %vm140, %vm141
    %v143 = vsel %vm142, %v134, %v139
    %v144 = vmul.f32 %v123, %v143
    %146 = vrot.lane.b32.xlu0 %v144, 20
    %v147 = vpop.permute.xlu0 %146
    %vm149 = vcmask 359744
    %150 = vst.msk [vmem:[#allocation2] sm:$0xff] %vm149, %v147
    %vm151 = vcmask 162816
    %v152 = vsel %vm151, %v113, 0.0
    %v153 = vrot.slane %v152, 4
    %v154 = vadd.f32 %v152, %v153
    %v155 = vrot.slane %v154, 2
    %v156 = vadd.f32 %v154, %v155
    %v157 = vrot.slane %v156, 1
    %v158 = vadd.f32 %v156, %v157
    %v159 = vmul.f32 %v158, %v56
    %v160 = vsub.f32 %v113, %v159
    %v161 = vmul.f32 %v160, %v160
    %v162 = vsel %vm151, %v161, 0.0
    %v163 = vrot.slane %v162, 4
    %v164 = vadd.f32 %v162, %v163
    %v165 = vrot.slane %v164, 2
    %v166 = vadd.f32 %v164, %v165
    %v167 = vrot.slane %v166, 1
    %v168 = vadd.f32 %v166, %v167
    %v169 = vmul.f32 %v168, %v56
    %v170 = vadd.f32 %v169, 1e-05
    %v171 = vrsqrt.pop %v170
    %v172 = vmul.f32 %v171, %v170
    %v173 = vmul.f32 %v172, %v171
    %v174 = vmul.f32 0.5, %v173
    %v175 = vsub.f32 1.5, %v174
    %v176 = vmul.f32 %v171, %v175
    %vm177 = vweird.f32 %v170
    %vm178 = vweird.f32 %v171
    %vm179 = vmor %vm177, %vm178
    %v180 = vsel %vm179, %v171, %v176
    %v181 = vmul.f32 %v160, %v180
    %183 = vrot.lane.b32.xlu0 %v181, 12
    %v184 = vpop.permute.xlu0 %183
    %vm186 = vcmask 261216
    %187 = vst.msk [vmem:[#allocation2] sm:$0xff] %vm186, %v184
    %v188 = vld [vmem:[%s1 + $0x30] sm:$0xff]
    %v189 = vld [vmem:[%s1 + $0x38] sm:$0xff]
    %v190 = vld [vmem:[%s1 + $0x40] sm:$0xf]
    %v191 = vsel %vm151, %v181, 0
    %v194 = vsel %vm86, %v190, 0
    %196 = vmatpush.msra.mxu0 0.0
    %197 = vmatpush.msra.mxu0 0.0
    %198 = vmatpush.msra.mxu0 0.0
    %199 = vmatpush.msra.mxu0 0.0
    %200 = vmatpush.msra.mxu0 0.0
    %201 = vmatpush.msra.mxu0 0.0
    %202 = vmatpush.msra.mxu0 0.0
    %203 = vmatpush.msra.mxu0 0.0
    %204 = vmatpush.msra.mxu0 0.0
    %205 = vmatpush.msra.mxu0 0.0
    %206 = vmatpush.msra.mxu0 0.0
    %207 = vmatpush.msra.mxu0 0.0
    %208 = vmatpush.msra.mxu0 0.0
    %209 = vmatpush.msra.mxu0 %v194
    %210 = vmatpush.msra.mxu0 %v189
    %211 = vmatpush.msra.mxu0 %v188
    %212 = vmatmul.f32.gmra.mxu0 %v191
    %v213 = vpop.f32.mrf.mxu0
    %v214 = vadd.f32 0.0, %v213
    %215 = vdwg.mxu0
    %v216 = vld [vmem:[%s1 + $0x48] sm:$0x1]
    %v217 = vperm.slane %v216, 0
    %v218 = vadd.f32 %v214, %v217
    %v219 = vtanh.pop %v218
    %vm220 = vcmask 97344
    %v221 = vsel %vm220, %v219, 0.0
    %v222 = vrot.slane %v221, 4
    %v223 = vadd.f32 %v221, %v222
    %v224 = vrot.slane %v223, 2
    %v225 = vadd.f32 %v223, %v224
    %v226 = vrot.slane %v225, 1
    %v227 = vadd.f32 %v225, %v226
    %v228 = vmul.f32 %v227, %v56
    %v229 = vsub.f32 %v219, %v228
    %v230 = vmul.f32 %v229, %v229
    %v231 = vsel %vm220, %v230, 0.0
    %v232 = vrot.slane %v231, 4
    %v233 = vadd.f32 %v231, %v232
    %v234 = vrot.slane %v233, 2
    %v235 = vadd.f32 %v233, %v234
    %v236 = vrot.slane %v235, 1
    %v237 = vadd.f32 %v235, %v236
    %v238 = vmul.f32 %v237, %v56
    %v239 = vadd.f32 %v238, 1e-05
    %v240 = vrsqrt.pop %v239
    %v241 = vmul.f32 %v240, %v239
    %v242 = vmul.f32 %v241, %v240
    %v243 = vmul.f32 0.5, %v242
    %v244 = vsub.f32 1.5, %v243
    %v245 = vmul.f32 %v240, %v244
    %vm246 = vweird.f32 %v239
    %vm247 = vweird.f32 %v240
    %vm248 = vmor %vm246, %vm247
    %v249 = vsel %vm248, %v240, %v245
    %v250 = vmul.f32 %v229, %v249
    %252 = vrot.lane.b32.xlu0 %v250, 36
    %v253 = vpop.permute.xlu0 %252
    %vm255 = vcmask 392544
    %256 = vst.msk [vmem:[#allocation2] sm:$0xff] %vm255, %v253
    %vm257 = vcmask 64512
    %v258 = vsel %vm257, %v219, 0.0
    %v259 = vrot.slane %v258, 4
    %v260 = vadd.f32 %v258, %v259
    %v261 = vrot.slane %v260, 2
    %v262 = vadd.f32 %v260, %v261
    %v263 = vrot.slane %v262, 1
    %v264 = vadd.f32 %v262, %v263
    %v265 = vmul.f32 %v264, %v56
    %v266 = vsub.f32 %v219, %v265
    %v267 = vmul.f32 %v266, %v266
    %v268 = vsel %vm257, %v267, 0.0
    %v269 = vrot.slane %v268, 4
    %v270 = vadd.f32 %v268, %v269
    %v271 = vrot.slane %v270, 2
    %v272 = vadd.f32 %v270, %v271
    %v273 = vrot.slane %v272, 1
    %v274 = vadd.f32 %v272, %v273
    %v275 = vmul.f32 %v274, %v56
    %v276 = vadd.f32 %v275, 1e-05
    %v277 = vrsqrt.pop %v276
    %v278 = vmul.f32 %v277, %v276
    %v279 = vmul.f32 %v278, %v277
    %v280 = vmul.f32 0.5, %v279
    %v281 = vsub.f32 1.5, %v280
    %v282 = vmul.f32 %v277, %v281
    %vm283 = vweird.f32 %v276
    %vm284 = vweird.f32 %v277
    %vm285 = vmor %vm283, %vm284
    %v286 = vsel %vm285, %v277, %v282
    %v287 = vmul.f32 %v266, %v286
    %289 = vrot.lane.b32.xlu0 %v287, 32
    %v290 = vpop.permute.xlu0 %289
    %vm292 = vcmask 326912
    %293 = vst.msk [vmem:[#allocation2] sm:$0xff] %vm292, %v290
    %v294 = vld [vmem:[%s1 + $0x50] sm:$0xff]
    %v295 = vld [vmem:[%s1 + $0x58] sm:$0x1]
    %v296 = vperm.slane %v295, 0
    %v297 = vsel %vm257, %v287, 0
    %299 = vmatpush.msra.mxu0 0.0
    %300 = vmatpush.msra.mxu0 0.0
    %301 = vmatpush.msra.mxu0 0.0
    %302 = vmatpush.msra.mxu0 0.0
    %303 = vmatpush.msra.mxu0 0.0
    %304 = vmatpush.msra.mxu0 0.0
    %305 = vmatpush.msra.mxu0 0.0
    %306 = vmatpush.msra.mxu0 0.0
    %307 = vmatpush.msra.mxu0 0.0
    %308 = vmatpush.msra.mxu0 0.0
    %309 = vmatpush.msra.mxu0 0.0
    %310 = vmatpush.msra.mxu0 0.0
    %311 = vmatpush.msra.mxu0 0.0
    %312 = vmatpush.msra.mxu0 0.0
    %313 = vmatpush.msra.mxu0 0.0
    %314 = vmatpush.msra.mxu0 %v294
    %315 = vmatmul.f32.gmra.mxu0 %v297
    %v316 = vpop.f32.mrf.mxu0
    %v317 = vadd.f32 %v296, %v316
    %318 = vdwg.mxu0
    %v319 = vtanh.pop %v317
    %vm320 = vcmask 15360
    %v321 = vsel %vm320, %v319, 0.0
    %v322 = vrot.slane %v321, 4
    %v323 = vadd.f32 %v321, %v322
    %v324 = vrot.slane %v323, 2
    %v325 = vadd.f32 %v323, %v324
    %v326 = vrot.slane %v325, 1
    %v327 = vadd.f32 %v325, %v326
    %v328 = vmul.f32 %v327, %v56
    %v329 = vsub.f32 %v319, %v328
    %v330 = vmul.f32 %v329, %v329
    %v331 = vsel %vm320, %v330, 0.0
    %v332 = vrot.slane %v331, 4
    %v333 = vadd.f32 %v331, %v332
    %v334 = vrot.slane %v333, 2
    %v335 = vadd.f32 %v333, %v334
    %v336 = vrot.slane %v335, 1
    %v337 = vadd.f32 %v335, %v336
    %v338 = vmul.f32 %v337, %v56
    %v339 = vadd.f32 %v338, 1e-05
    %v340 = vrsqrt.pop %v339
    %v341 = vmul.f32 %v340, %v339
    %v342 = vmul.f32 %v341, %v340
    %v343 = vmul.f32 0.5, %v342
    %v344 = vsub.f32 1.5, %v343
    %v345 = vmul.f32 %v340, %v344
    %vm346 = vweird.f32 %v339
    %vm347 = vweird.f32 %v340
    %vm348 = vmor %vm346, %vm347
    %v349 = vsel %vm348, %v340, %v345
    %v350 = vmul.f32 %v329, %v349
    %352 = vrot.lane.b32.xlu0 %v350, 48
    %v353 = vpop.permute.xlu0 %352
    %vm355 = vcmask 408960
    %356 = vst.msk [vmem:[#allocation2] sm:$0xff] %vm355, %v353
    // Predicated region
    $region10: #{fwd.1} parent=1 // pred_check
      _
    $region11: #{fwd.1} parent=1 // pred_check_branch
      %358 = sbr.rel (0) target = $region13
    $region12: #{fwd.1} parent=1 // pred_region
      %360 = vsyncadd [#allocation3], 0
      %s362 = sshll.u32 [#allocation2], 4
      %s363 = int_to_ptr.vmem [resolvable:$true] %s362
      %s364 = sshll.u32 %s2, 4
      %s365 = int_to_ptr.hbm [resolvable:$true] %s364
      %367 = dma.vmem_to_hbm [thread:$0]  %s363, 128, %s365, [#allocation3]
    $region13: #{fwd.1} parent=1 // pred_fallthru
      _
    // Predicated region
    $region14: #{fwd.1} parent=1 // pred_check
      _
    $region15: #{fwd.1} parent=1 // pred_check_branch
      %369 = sbr.rel (0) target = $region17
    $region16: #{fwd.1} parent=1 // pred_region
      %371 = dma.done [#allocation3], 128
    $region17: #{fwd.1} parent=1 // pred_fallthru
      _
    %372 = vsyncpa [#allocation3], 1

</llo_original>
